<compile_context>
chip_gen: v7x
topology: tpu7x:2x2x1
jax: 0.10.0
libtpu: 0.0.40
codegen_flags: <defaults>
</compile_context>

<pallas_src>
import functools

import jax
import jax.numpy as jnp
from jax.experimental import pallas as pl
from jax.experimental.pallas import tpu as pltpu

_EPS = 1e-6  # F.pairwise_distance default eps (added to the difference)


def _triplet_loss_kernel(a_ref, p_ref, n_ref, o_ref, *, margin, batch,
                         block_rows, d_chunk, mask_rows):
    # a/p/n refs are [TB, D] tiles of the current batch block (native dtype).
    D = a_ref.shape[-1]

    def sumsq(x_ref, y_ref):
        # Row-wise sum over D of (x - y + eps)^2, f32 accumulation over static
        # D chunks (bounds the widened working set for very wide embeddings).
        acc = None
        for start in range(0, D, d_chunk):
            size = min(d_chunk, D - start)
            x = x_ref[:, start:start + size].astype(jnp.float32)
            y = y_ref[:, start:start + size].astype(jnp.float32)
            d = x - y + _EPS
            s = jnp.sum(d * d, axis=-1, keepdims=True)  # [TB, 1]
            acc = s if acc is None else acc + s
        return acc

    pos_dist = jnp.sqrt(sumsq(a_ref, p_ref))  # [TB, 1]
    neg_dist = jnp.sqrt(sumsq(a_ref, n_ref))  # [TB, 1]
    losses = jnp.maximum(pos_dist - neg_dist + margin, 0.0)  # [TB, 1]

    if mask_rows:
        # Mask rows of the (possibly partial) last batch tile so padding does
        # not contribute to the mean (also drops NaN/inf from garbage rows).
        row = pl.program_id(0) * block_rows + jax.lax.broadcasted_iota(
            jnp.int32, losses.shape, 0)
        losses = jnp.where(row < batch, losses, 0.0)

    # Per-block partial sum written to SMEM; divide-by-B happens in wrapper.
    o_ref[0, 0] = jnp.sum(losses)


def _vmem_capacity_bytes():
    try:
        return int(pltpu.get_tpu_info().vmem_capacity_bytes)
    except Exception:
        pass
    try:
        kind = jax.devices()[0].device_kind.lower()
        if "v5" in kind or "v6" in kind:
            return 128 << 20
    except Exception:
        pass
    return 64 << 20  # conservative (v7x-safe) default


def triplet_loss(anchor, positive, negative, margin=1.0, block_rows=None):
    B, D = anchor.shape
    itemsize = jnp.dtype(anchor.dtype).itemsize
    # Sublane packing: 8 rows for f32, 16 for bf16, 32 for int8/fp8.
    sublane = max(8, 32 // max(itemsize, 1))

    vmem_cap = _vmem_capacity_bytes()
    # ~3/8 of physical VMEM for input pipeline buffers: ~48 MiB on v5e/v6e,
    # ~24 MiB on v7x; split over 3 inputs x 2 pipeline buffers.
    per_input_bytes = ((vmem_cap * 3) // 8) // (3 * 2)

    if block_rows is None:
        tb = per_input_bytes // (D * itemsize)
        tb = max(sublane, (tb // sublane) * sublane)
    else:
        # Validate / round a user-supplied block_rows to the sublane packing.
        tb = max(sublane, (int(block_rows) // sublane) * sublane)

    if B <= sublane:
        tb = B  # single tiny block: block dim == full array dim is legal
    else:
        # Guarantee >= 2 grid blocks so both v7x TensorCores each stream half
        # the batch ("parallel" grid axis); harmless on single-TC chips.
        two_blocks = ((pl.cdiv(B, 2) + sublane - 1) // sublane) * sublane
        tb = min(tb, two_blocks)

    num_blocks = pl.cdiv(B, tb)
    mask_rows = (B % tb) != 0

    # Bound the f32 working set for very wide embeddings.
    d_chunk = D if D <= 1024 else 1024

    # Scoped-VMEM limit: double-buffered input tiles + headroom, clamped below
    # physical VMEM (<= 56 MiB on v7x, <= 120 MiB on v5e/v6e).
    vmem_bytes = 3 * 2 * tb * D * itemsize + (4 << 20)
    vmem_bytes = int(min(max(vmem_bytes, 4 << 20), vmem_cap - (8 << 20)))

    kernel = functools.partial(
        _triplet_loss_kernel, margin=float(margin), batch=B, block_rows=tb,
        d_chunk=d_chunk, mask_rows=mask_rows)

    in_spec = pl.BlockSpec((tb, D), lambda i: (i, 0))
    partial_sums = pl.pallas_call(
        kernel,
        out_shape=jax.ShapeDtypeStruct((num_blocks, 1), jnp.float32),
        grid=(num_blocks,),
        in_specs=[in_spec, in_spec, in_spec],
        out_specs=pl.BlockSpec((1, 1), lambda i: (i, 0),
                               memory_space=pltpu.MemorySpace.SMEM),
        compiler_params=pltpu.CompilerParams(
            dimension_semantics=("parallel",),
            vmem_limit_bytes=vmem_bytes,
        ),
        cost_estimate=pl.CostEstimate(
            flops=8 * B * D,
            transcendentals=2 * B,
            bytes_accessed=3 * B * D * itemsize,
        ),
    )(anchor, positive, negative)

    return jnp.sum(partial_sums) / B


def _reference(anchor, positive, negative, margin=1.0):
    a = anchor.astype(jnp.float32)
    p = positive.astype(jnp.float32)
    n = negative.astype(jnp.float32)
    pos = jnp.sqrt(jnp.sum((a - p + _EPS) ** 2, axis=-1))
    neg = jnp.sqrt(jnp.sum((a - n + _EPS) ** 2, axis=-1))
    return jnp.mean(jnp.maximum(pos - neg + margin, 0.0))


if __name__ == "__main__":
    key = jax.random.PRNGKey(0)
    keys = jax.random.split(key, 9)

    # Case 1: small shapes consistent with the module (embeddings [B, D]).
    B, D = 8, 32
    anchor = jax.random.normal(keys[0], (B, D), dtype=jnp.float32)
    positive = jax.random.normal(keys[1], (B, D), dtype=jnp.float32)
    negative = jax.random.normal(keys[2], (B, D), dtype=jnp.float32)
    loss = triplet_loss(anchor, positive, negative, margin=1.0)
    jax.block_until_ready(loss)
    ref = _reference(anchor, positive, negative, margin=1.0)
    assert jnp.allclose(loss, ref, rtol=1e-5, atol=1e-5), (loss, ref)

    # Case 2: exercise the batch-tiled pipeline + partial-tile masking
    # (B not a multiple of the user-supplied tile size).
    B2, D2 = 50, 128
    a2 = jax.random.normal(keys[3], (B2, D2), dtype=jnp.float32)
    p2 = jax.random.normal(keys[4], (B2, D2), dtype=jnp.float32)
    n2 = jax.random.normal(keys[5], (B2, D2), dtype=jnp.float32)
    loss2 = triplet_loss(a2, p2, n2, margin=1.0, block_rows=16)
    jax.block_until_ready(loss2)
    ref2 = _reference(a2, p2, n2, margin=1.0)
    assert jnp.allclose(loss2, ref2, rtol=1e-5, atol=1e-5), (loss2, ref2)

    # Case 3: bf16 inputs (bf16 on the wire, f32 math, sublane=16 rounding,
    # auto tile sizing capped to the >=2-block split, partial last tile).
    B3, D3 = 40, 64
    a3 = jax.random.normal(keys[6], (B3, D3), dtype=jnp.bfloat16)
    p3 = jax.random.normal(keys[7], (B3, D3), dtype=jnp.bfloat16)
    n3 = jax.random.normal(keys[8], (B3, D3), dtype=jnp.bfloat16)
    loss3 = triplet_loss(a3, p3, n3, margin=1.0)
    jax.block_until_ready(loss3)
    ref3 = _reference(a3, p3, n3, margin=1.0)
    assert jnp.allclose(loss3, ref3, rtol=1e-4, atol=1e-4), (loss3, ref3)

    print("KERNEL_OK")
</pallas_src>

<mosaic_0001>
module attributes {stable_mosaic.version = 11 : i64} {
  func.func @_triplet_loss_kernel(%arg0: i32, %arg1: memref<8x32xf32, #tpu.memory_space<vmem>>, %arg2: memref<8x32xf32, #tpu.memory_space<vmem>>, %arg3: memref<8x32xf32, #tpu.memory_space<vmem>>, %arg4: memref<1x1xf32, #tpu.memory_space<smem>>) attributes {dimension_semantics = [#tpu.dimension_semantics<parallel>], iteration_bounds = array<i64: 1>, scalar_prefetch = 0 : i64, scratch_operands = 0 : i64, tpu.core_type = #tpu.core_type<tc>, window_params = [{transform_indices = @transform_0, window_bounds = array<i64: 8, 32>}, {transform_indices = @transform_1, window_bounds = array<i64: 8, 32>}, {transform_indices = @transform_2, window_bounds = array<i64: 8, 32>}, {transform_indices = @transform_3, window_bounds = array<i64: 1, 1>}]} {
    %c0 = arith.constant 0 : index
    %c0_0 = arith.constant 0 : index
    %0 = vector.load %arg1[%c0, %c0_0] : memref<8x32xf32, #tpu.memory_space<vmem>>, vector<8x32xf32>
    %c0_1 = arith.constant 0 : index
    %c0_2 = arith.constant 0 : index
    %1 = vector.load %arg2[%c0_1, %c0_2] : memref<8x32xf32, #tpu.memory_space<vmem>>, vector<8x32xf32>
    %2 = arith.subf %0, %1 : vector<8x32xf32>
    %cst = arith.constant 9.99999997E-7 : f32
    %3 = vector.broadcast %cst : f32 to vector<8x32xf32>
    %4 = arith.addf %2, %3 : vector<8x32xf32>
    %5 = arith.mulf %4, %4 : vector<8x32xf32>
    %cst_3 = arith.constant dense<0.000000e+00> : vector<8xf32>
    %6 = vector.multi_reduction <add>, %5, %cst_3 [1] : vector<8x32xf32> to vector<8xf32>
    %7 = vector.shape_cast %6 : vector<8xf32> to vector<8x1xf32>
    %8 = math.sqrt %7 : vector<8x1xf32>
    %c0_4 = arith.constant 0 : index
    %c0_5 = arith.constant 0 : index
    %9 = vector.load %arg1[%c0_4, %c0_5] : memref<8x32xf32, #tpu.memory_space<vmem>>, vector<8x32xf32>
    %c0_6 = arith.constant 0 : index
    %c0_7 = arith.constant 0 : index
    %10 = vector.load %arg3[%c0_6, %c0_7] : memref<8x32xf32, #tpu.memory_space<vmem>>, vector<8x32xf32>
    %11 = arith.subf %9, %10 : vector<8x32xf32>
    %cst_8 = arith.constant 9.99999997E-7 : f32
    %12 = vector.broadcast %cst_8 : f32 to vector<8x32xf32>
    %13 = arith.addf %11, %12 : vector<8x32xf32>
    %14 = arith.mulf %13, %13 : vector<8x32xf32>
    %cst_9 = arith.constant dense<0.000000e+00> : vector<8xf32>
    %15 = vector.multi_reduction <add>, %14, %cst_9 [1] : vector<8x32xf32> to vector<8xf32>
    %16 = vector.shape_cast %15 : vector<8xf32> to vector<8x1xf32>
    %17 = math.sqrt %16 : vector<8x1xf32>
    %18 = arith.subf %8, %17 : vector<8x1xf32>
    %cst_10 = arith.constant 1.000000e+00 : f32
    %19 = vector.broadcast %cst_10 : f32 to vector<8x1xf32>
    %20 = arith.addf %18, %19 : vector<8x1xf32>
    %cst_11 = arith.constant 0.000000e+00 : f32
    %21 = vector.broadcast %cst_11 : f32 to vector<8x1xf32>
    %22 = arith.maximumf %20, %21 : vector<8x1xf32>
    %23 = vector.shape_cast %22 : vector<8x1xf32> to vector<1x8x1xf32>
    %cst_12 = arith.constant dense<0.000000e+00> : vector<1xf32>
    %24 = vector.multi_reduction <add>, %23, %cst_12 [1, 2] : vector<1x8x1xf32> to vector<1xf32>
    %25 = vector.shape_cast %24 : vector<1xf32> to vector<1x1x1xf32>
    %26 = vector.extract %25[0, 0, 0] : f32 from vector<1x1x1xf32>
    %c0_13 = arith.constant 0 : index
    %c0_14 = arith.constant 0 : index
    %27 = memref.load %arg4[%c0_13, %c0_14] : memref<1x1xf32, #tpu.memory_space<smem>>
    memref.store %26, %arg4[%c0_13, %c0_14] : memref<1x1xf32, #tpu.memory_space<smem>>
    return
  }
  func.func @transform_0(%arg0: i32) -> (i32, i32) {
    %c0_i32 = arith.constant 0 : i32
    %c0_i32_0 = arith.constant 0 : i32
    return %arg0, %c0_i32 : i32, i32
  }
  func.func @transform_1(%arg0: i32) -> (i32, i32) {
    %c0_i32 = arith.constant 0 : i32
    %c0_i32_0 = arith.constant 0 : i32
    return %arg0, %c0_i32 : i32, i32
  }
  func.func @transform_2(%arg0: i32) -> (i32, i32) {
    %c0_i32 = arith.constant 0 : i32
    %c0_i32_0 = arith.constant 0 : i32
    return %arg0, %c0_i32 : i32, i32
  }
  func.func @transform_3(%arg0: i32) -> (i32, i32) {
    %c0_i32 = arith.constant 0 : i32
    %c0_i32_0 = arith.constant 0 : i32
    return %arg0, %c0_i32 : i32, i32
  }
}

</mosaic_0001>

<llo_original>
// kernel: tpu_custom_call.1
$region0: #{tpu_custom_call.1}
  #allocation0 [shape = 'u32[]', space=smem, size = 0x4, offset = 0x4, fixed_abs, tag = 'smem constant byte address 0x4 - core index']
  #allocation1 [shape = 'u32[144,128]{1,0:T(1,128)}', space=vmem, size = 0x12000, scoped, tag = 'internal scratch']
  %s0 = inlined_call_operand.hbm [shape: f32[8,32], index: 0, kind: input, shape index: {}]
  %s1 = inlined_call_operand.hbm [shape: f32[8,32], index: 1, kind: input, shape index: {}]
  %s2 = inlined_call_operand.hbm [shape: f32[8,32], index: 2, kind: input, shape index: {}]
  %s3 = inlined_call_operand.hbm [shape: f32[1,1], index: 3, kind: output, shape index: {}]
  %s4 = sld [smem:[#allocation0]]
  $region34: #{tpu_custom_call.1} parent=0
    _
  %s6 = ssub.s32 1, %s4
  %s7 = scalar_select 0, %s6, %s4
  $region1: #{tpu_custom_call.1} parent=0
    #allocation2 [shape = 'u8[4096]{0}', space=vmem, size = 0x1000, scoped, tag = 'input window, operand 0, single buffered']
    #allocation3 [shape = 's32[1]{0}', space=sflag, size = 0x4, scoped, tag = 'scoped memory for tpu_custom_call.1']
    #allocation4 [shape = 's32[1]{0}', space=sflag, size = 0x4, scoped, tag = 'scoped memory for tpu_custom_call.1']
    #allocation5 [shape = 'u8[4096]{0}', space=vmem, size = 0x1000, scoped, tag = 'input window, operand 1, single buffered']
    #allocation6 [shape = 's32[1]{0}', space=sflag, size = 0x4, scoped, tag = 'scoped memory for tpu_custom_call.1']
    #allocation7 [shape = 'u8[4096]{0}', space=vmem, size = 0x1000, scoped, tag = 'input window, operand 2, single buffered']
    #allocation8 [shape = 'u8[512]{0}', space=smem, size = 0x200, scoped, tag = 'output window, operand 0, single buffered']
    %8 = vsyncpa [#allocation3], 0
    %9 = vsyncpa [#allocation6], 0
    %10 = vsyncpa [#allocation4], 0
    // Predicated region
    $region2: #{tpu_custom_call.1} parent=1 // pred_check
      _
    $region3: #{tpu_custom_call.1} parent=1 // pred_check_branch
      %12 = sbr.rel (0) target = $region5
    $region4: #{tpu_custom_call.1} parent=1 // pred_region
      %s14 = ssub.s32 128, 128
      %15 = vsyncadd [#allocation3], %s14
      %s17 = sshll.u32 [#allocation2], 4
      %s18 = int_to_ptr.vmem [resolvable:$true] %s17
      %20 = dma.hbm_to_vmem [thread:$0]  %s0, 128, %s18, [#allocation3]
    $region5: #{tpu_custom_call.1} parent=1 // pred_fallthru
      _
    // Predicated region
    $region6: #{tpu_custom_call.1} parent=1 // pred_check
      _
    $region7: #{tpu_custom_call.1} parent=1 // pred_check_branch
      %22 = sbr.rel (0) target = $region9
    $region8: #{tpu_custom_call.1} parent=1 // pred_region
      %s24 = ssub.s32 128, 128
      %25 = vsyncadd [#allocation6], %s24
      %s27 = sshll.u32 [#allocation5], 4
      %s28 = int_to_ptr.vmem [resolvable:$true] %s27
      %30 = dma.hbm_to_vmem [thread:$0]  %s1, 128, %s28, [#allocation6]
    $region9: #{tpu_custom_call.1} parent=1 // pred_fallthru
      _
    // Predicated region
    $region10: #{tpu_custom_call.1} parent=1 // pred_check
      _
    $region11: #{tpu_custom_call.1} parent=1 // pred_check_branch
      %32 = sbr.rel (0) target = $region13
    $region12: #{tpu_custom_call.1} parent=1 // pred_region
      %s34 = ssub.s32 128, 128
      %35 = vsyncadd [#allocation6], %s34
      %s37 = sshll.u32 [#allocation7], 4
      %s38 = int_to_ptr.vmem [resolvable:$true] %s37
      %40 = dma.hbm_to_vmem [thread:$0]  %s2, 128, %s38, [#allocation6]
    $region13: #{tpu_custom_call.1} parent=1 // pred_fallthru
      _
    // Predicated region
    $region14: #{tpu_custom_call.1} parent=1 // pred_check
      _
    $region15: #{tpu_custom_call.1} parent=1 // pred_check_branch
      %42 = sbr.rel (0) target = $region17
    $region16: #{tpu_custom_call.1} parent=1 // pred_region
      %43 = dma.done [#allocation3], 128
    $region17: #{tpu_custom_call.1} parent=1 // pred_fallthru
      _
    // Predicated region
    $region18: #{tpu_custom_call.1} parent=1 // pred_check
      _
    $region19: #{tpu_custom_call.1} parent=1 // pred_check_branch
      %45 = sbr.rel (0) target = $region21
    $region20: #{tpu_custom_call.1} parent=1 // pred_region
      %46 = dma.done [#allocation6], 128
    $region21: #{tpu_custom_call.1} parent=1 // pred_fallthru
      _
    // Predicated region
    $region22: #{tpu_custom_call.1} parent=1 // pred_check
      _
    $region23: #{tpu_custom_call.1} parent=1 // pred_check_branch
      %48 = sbr.rel (0) target = $region25
    $region24: #{tpu_custom_call.1} parent=1 // pred_region
      %49 = dma.done [#allocation6], 128
    $region25: #{tpu_custom_call.1} parent=1 // pred_fallthru
      _
    %v50 = vld [vmem:[#allocation2] sm:$0xff]
    %v51 = vld [vmem:[#allocation5] sm:$0xff]
    %v52 = vsub.f32 %v50, %v51
    %v53 = vadd.f32 %v52, 1e-06
    %v54 = vmul.f32 %v53, %v53
    %vm55 = vcmask 261120
    %v56 = vsel %vm55, %v54, 0.0
    %57 = vadd.xlane.f32.xlu0 %v56
    %v58 = vpop.xlane.xlu0 %57
    %v59 = vrsqrt.pop %v58
    %v60 = vmul.f32 %v58, %v59
    %vm61 = vcmp.eq.f32.partialorder %v58, inf
    %v62 = vsel %vm61, %v58, %v60
    %vm63 = vcmp.eq.f32.partialorder %v58, 0.0
    %v64 = vand.u32 %v58, 2147483648
    %v65 = vsel %vm63, %v64, %v62
    %v66 = vld [vmem:[#allocation7] sm:$0xff]
    %v67 = vsub.f32 %v50, %v66
    %v68 = vadd.f32 %v67, 1e-06
    %v69 = vmul.f32 %v68, %v68
    %v70 = vsel %vm55, %v69, 0.0
    %71 = vadd.xlane.f32.xlu0 %v70
    %v72 = vpop.xlane.xlu0 %71
    %v73 = vrsqrt.pop %v72
    %v74 = vmul.f32 %v72, %v73
    %vm75 = vcmp.eq.f32.partialorder %v72, inf
    %v76 = vsel %vm75, %v72, %v74
    %vm77 = vcmp.eq.f32.partialorder %v72, 0.0
    %v78 = vand.u32 %v72, 2147483648
    %v79 = vsel %vm77, %v78, %v76
    %v80 = vsub.f32 %v65, %v79
    %v81 = vadd.f32 %v80, 1.0
    %v82 = vmax.f32 %v81, 0.0
    %vm83 = vcmask 7168
    %v84 = vsel %vm83, %v82, 0.0
    %85 = vadd.xlane.f32.xlu0 %v84
    %v86 = vpop.xlane.xlu0 %85
    %v87 = vrot.slane %v86, 4
    %v88 = vadd.f32 %v86, %v87
    %v89 = vrot.slane %v88, 2
    %v90 = vadd.f32 %v88, %v89
    %v91 = vrot.slane %v90, 1
    %v92 = vadd.f32 %v90, %v91
    %s93 = vtos %v92
    %s94 = scalar_lea.smem [#allocation8], 0
    %95 = sst [smem:[%s94]] %s93
    // Predicated region
    $region26: #{tpu_custom_call.1} parent=1 // pred_check
      _
    $region27: #{tpu_custom_call.1} parent=1 // pred_check_branch
      %97 = sbr.rel (0) target = $region29
    $region28: #{tpu_custom_call.1} parent=1 // pred_region
      %s99 = ssub.s32 16, 16
      %100 = vsyncadd [#allocation4], %s99
      %103 = dma.smem_to_hbm [#allocation8], 16, %s3, [#allocation4]
    $region29: #{tpu_custom_call.1} parent=1 // pred_fallthru
      _
    // Predicated region
    $region30: #{tpu_custom_call.1} parent=1 // pred_check
      _
    $region31: #{tpu_custom_call.1} parent=1 // pred_check_branch
      %105 = sbr.rel (0) target = $region33
    $region32: #{tpu_custom_call.1} parent=1 // pred_region
      %106 = dma.done [#allocation4], 16
    $region33: #{tpu_custom_call.1} parent=1 // pred_fallthru
      _
    %107 = sfence
    %108 = vsyncpa [#allocation3], 1
    %109 = vsyncpa [#allocation6], 1
    %110 = vsyncpa [#allocation4], 1

</llo_original>
